<compile_context>
chip_gen: v7x
topology: tpu7x:2x2x1
jax: 0.10.0
libtpu: 0.0.40
codegen_flags: <defaults>
</compile_context>

<pallas_src>
import math

import jax
import jax.numpy as jnp
import numpy as np
from jax import lax
from jax.experimental import pallas as pl
from jax.experimental.pallas import tpu as pltpu

_LANES = 128
_TARGET_TILE_BYTES = 4 * 1024 * 1024       # ~4 MiB per buffer for the tiled path
_SINGLE_BLOCK_MAX_BYTES = 4 * 1024 * 1024  # fast path: whole kl in one block


def _pid_epilogue(state_ref, out_ref, kl_loss):
    """PID math + packed (1, 128) single-store epilogue.

    state_ref (SMEM, f32[5]): [exp_KL, Kp, Ki, I_k1, W_k1]
    kl_loss: (1, 1) f32 total sum of kl.
    out lanes: 0=loss, 1=beta, 2=Wk (new W_k1), 3=Ik (new I_k1), 4=error_k.
    """
    exp_kl = state_ref[0]
    kp = state_ref[1]
    ki = state_ref[2]
    i_k1 = state_ref[3]
    w_k1 = state_ref[4]

    error_k = exp_kl - kl_loss                        # (1, 1)
    # _Kp_fun(err) = 1/(1+exp(err)).  exp -> inf for large positive err gives
    # Pk = Kp*0 + 1, matching the torch float behaviour exactly.
    pk = kp * (1.0 / (1.0 + jnp.exp(error_k))) + 1.0
    # Anti-windup: freeze the integrator if the previous Wk dropped below 1.
    ik_free = i_k1 + ki * error_k
    ik_frozen = jnp.full_like(error_k, i_k1)
    ik = jnp.where(jnp.full_like(error_k, w_k1) < 1.0, ik_frozen, ik_free)
    wk = pk + ik                                      # new (unclamped) W_k1
    beta = jnp.maximum(wk, 1.0)                       # beta applied to the loss
    loss = kl_loss * beta

    # Pack all scalars into one lane-dense row, written once.
    lane = lax.broadcasted_iota(jnp.int32, out_ref.shape, 1)
    packed = jnp.where(lane == 0, loss, 0.0)
    packed = jnp.where(lane == 1, beta, packed)
    packed = jnp.where(lane == 2, wk, packed)
    packed = jnp.where(lane == 3, ik, packed)
    packed = jnp.where(lane == 4, error_k, packed)
    out_ref[...] = packed


def _pid_small_kernel(state_ref, kl_ref, out_ref):
    # Whole kl in one VMEM block: one DMA, one reduce, one packed store.
    kl_loss = jnp.sum(kl_ref[...].astype(jnp.float32), keepdims=True)  # (1, 1)
    _pid_epilogue(state_ref, out_ref, kl_loss)


def _make_tiled_kernel(total_rows, tile_rows):
    ragged = (total_rows % tile_rows) != 0

    def kernel(state_ref, kl_ref, out_ref, acc_ref):
        i = pl.program_id(0)
        last = pl.num_programs(0) - 1

        @pl.when(i == 0)
        def _():
            acc_ref[...] = jnp.zeros_like(acc_ref)

        def accumulate(mask_tail):
            x = kl_ref[...].astype(jnp.float32)
            if mask_tail:
                # Boundary-block padding values are unspecified -> zero out
                # rows past the true end of kl before accumulating.
                row = i * tile_rows + lax.broadcasted_iota(
                    jnp.int32, x.shape, 0)
                x = jnp.where(row < total_rows, x, 0.0)
            acc_ref[...] += jnp.sum(x, axis=0, keepdims=True)

        if ragged:
            @pl.when(i != last)
            def _():
                accumulate(False)

            @pl.when(i == last)
            def _():
                accumulate(True)
        else:
            accumulate(False)

        @pl.when(i == last)
        def _():
            kl_loss = jnp.sum(acc_ref[...], axis=1, keepdims=True)  # (1, 1)
            _pid_epilogue(state_ref, out_ref, kl_loss)

    return kernel


def _as_2d(kl):
    if kl.ndim == 2:
        return kl
    if kl.ndim == 0:
        return kl.reshape(1, 1)
    if kl.ndim == 1:
        return kl.reshape(1, kl.shape[0])
    # Collapse leading dims; contiguous row-major collapse, no lane relayout.
    return kl.reshape(-1, kl.shape[-1])


@jax.jit
def _pid_forward(kl, exp_kl, kp, ki, i_k1, w_k1):
    """Returns (loss, beta, new_W_k1, new_I_k1, error_k) as device scalars."""
    state = jnp.stack(
        [
            jnp.asarray(exp_kl, jnp.float32),
            jnp.asarray(kp, jnp.float32),
            jnp.asarray(ki, jnp.float32),
            jnp.asarray(i_k1, jnp.float32),
            jnp.asarray(w_k1, jnp.float32),
        ]
    )

    kl2d = _as_2d(kl)
    rows, cols = kl2d.shape
    itemsize = kl2d.dtype.itemsize
    nbytes = rows * cols * itemsize
    out_shape = jax.ShapeDtypeStruct((1, _LANES), jnp.float32)
    state_spec = pl.BlockSpec(memory_space=pltpu.MemorySpace.SMEM)

    if nbytes <= _SINGLE_BLOCK_MAX_BYTES:
        # Fast path: one grid step, whole kl as a single full-array block.
        out = pl.pallas_call(
            _pid_small_kernel,
            out_shape=out_shape,
            grid_spec=pltpu.PrefetchScalarGridSpec(
                num_scalar_prefetch=0,
                grid=(1,),
                in_specs=[
                    state_spec,
                    pl.BlockSpec((rows, cols), lambda i: (0, 0)),
                ],
                out_specs=pl.BlockSpec((1, _LANES), lambda i: (0, 0)),
            ),
            compiler_params=pltpu.CompilerParams(
                dimension_semantics=("arbitrary",),
            ),
        )(state, kl2d)
        return out[0, 0], out[0, 1], out[0, 2], out[0, 3], out[0, 4]

    # Large-kl path: row-tile the natural 2-D layout; no pad, no relayout.
    sublane = max(8, 32 // itemsize)          # f32: 8, bf16: 16, int8/fp8: 32
    row_bytes = cols * itemsize
    if sublane * row_bytes > _TARGET_TILE_BYTES:
        # Extremely wide rows (rare): relayout to a lane-dense (rows, 128)
        # slab so row tiles stay within the target size.  Zero padding never
        # changes the sum.
        n = rows * cols
        rows = pl.cdiv(n, _LANES)
        flat = kl2d.reshape(-1)
        pad = rows * _LANES - n
        if pad:
            flat = jnp.pad(flat, (0, pad))
        kl2d = flat.reshape(rows, _LANES)
        cols = _LANES
        row_bytes = cols * itemsize

    tile_rows = max(
        sublane, (_TARGET_TILE_BYTES // row_bytes) // sublane * sublane)
    grid = pl.cdiv(rows, tile_rows)

    out = pl.pallas_call(
        _make_tiled_kernel(rows, tile_rows),
        out_shape=out_shape,
        grid_spec=pltpu.PrefetchScalarGridSpec(
            num_scalar_prefetch=0,
            grid=(grid,),
            in_specs=[
                state_spec,
                # kl tiles: double-buffered by the BlockSpec pipeline.
                pl.BlockSpec((tile_rows, cols), lambda i: (i, 0)),
            ],
            out_specs=pl.BlockSpec((1, _LANES), lambda i: (0, 0)),
            scratch_shapes=[pltpu.VMEM((1, cols), jnp.float32)],
        ),
        compiler_params=pltpu.CompilerParams(
            dimension_semantics=("arbitrary",),
            vmem_limit_bytes=32 * 1024 * 1024,
        ),
    )(state, kl2d)
    return out[0, 0], out[0, 1], out[0, 2], out[0, 3], out[0, 4]


class PIDControl:
    """Pallas-backed port of disentanglement_lib control_vae PIDControl."""

    def __init__(self, C, total_steps, init_C=1, step_iteration=5000,
                 Kp=0.01, Ki=-0.001):
        self.C = C
        self.total_steps = total_steps
        self.current_C = init_C
        self.step_value = (C - init_C) / (total_steps // step_iteration)
        self.step_iteration = step_iteration
        self.Kp = Kp
        self.Ki = Ki
        # Controller state lives on device; fed straight back into the next
        # kernel call (no per-step device->host sync).
        self.I_k1 = jnp.float32(0.0)
        self.W_k1 = jnp.float32(1.0)
        self.e_k1 = jnp.float32(0.0)

    def forward(self, data_batch, model, kl, z_mean, z_logvar, z_sampled):
        # Host-side step scheduling (cheap Python control flow, as in torch).
        if model.global_step % self.step_iteration == 0:
            self.current_C += self.step_value
        exp_KL = min(self.C, self.current_C)

        loss, beta, wk, ik, err = _pid_forward(
            kl, exp_KL, self.Kp, self.Ki, self.I_k1, self.W_k1
        )
        # All device scalars; no blocking transfers per training step.
        self.W_k1 = wk
        self.I_k1 = ik
        self.e_k1 = err  # tracked for parity with stateful PID variants
        model.summary["beta"] = beta
        model.summary["exp_KL"] = exp_KL
        model.summary["e_t"] = err
        return loss


class _DummyModel:
    def __init__(self, global_step=0):
        self.global_step = global_step
        self.summary = {}


if __name__ == "__main__":
    key = jax.random.PRNGKey(0)
    k1, k2, k3, k4, k5, k6 = jax.random.split(key, 6)

    batch, num_latent = 2, 32
    # Per-dimension KL contributions (non-negative like a real KL).
    kl = jax.random.uniform(k1, (batch, num_latent), jnp.float32) * 0.1
    z_mean = jax.random.normal(k2, (batch, num_latent), jnp.float32)
    z_logvar = jax.random.normal(k3, (batch, num_latent), jnp.float32)
    z_sampled = jax.random.normal(k4, (batch, num_latent), jnp.float32)
    data_batch = jax.random.normal(k5, (batch, 4, 16, 16), jnp.float32)  # unused

    pid = PIDControl(C=20.0, total_steps=100000, init_C=1,
                     step_iteration=5000, Kp=0.01, Ki=-0.001)
    model = _DummyModel(global_step=0)

    # Run two steps to exercise the on-device state feedback path.
    losses = []
    for step in range(2):
        model.global_step = step
        loss = pid.forward(data_batch, model, kl, z_mean, z_logvar, z_sampled)
        losses.append(jax.block_until_ready(loss))

    # Host-side reference mirroring the exact PyTorch arithmetic.
    C, total_steps, init_C, step_iteration = 20.0, 100000, 1, 5000
    Kp, Ki = 0.01, -0.001
    current_C = float(init_C)
    step_value = (C - init_C) / (total_steps // step_iteration)
    I_k1, W_k1 = 0.0, 1.0
    kl_sum = float(np.asarray(kl, np.float32).sum())
    ref_losses = []
    for step in range(2):
        if step % step_iteration == 0:
            current_C += step_value
        exp_KL = min(C, current_C)
        err = exp_KL - kl_sum
        Pk = Kp * (1.0 / (1.0 + math.exp(err))) + 1.0
        Ik = I_k1 if W_k1 < 1.0 else I_k1 + Ki * err
        Wk = Pk + Ik
        W_k1, I_k1 = Wk, Ik
        ref_losses.append(kl_sum * max(Wk, 1.0))

    np.testing.assert_allclose(np.asarray(losses, np.float32),
                               np.asarray(ref_losses, np.float32),
                               rtol=1e-5, atol=1e-5)
    np.testing.assert_allclose(np.asarray(pid.W_k1), W_k1, rtol=1e-5, atol=1e-5)
    np.testing.assert_allclose(np.asarray(pid.I_k1), I_k1, rtol=1e-5, atol=1e-5)

    # Also exercise the large-kl tiled path (ragged last tile -> in-kernel mask).
    kl_big = jax.random.uniform(k6, (20000, 64), jnp.float32) * 1e-3
    loss_b, beta_b, wk_b, ik_b, err_b = _pid_forward(
        kl_big, 18.0, 0.01, -0.001, 0.0, 1.0)
    jax.block_until_ready(loss_b)
    kl_sum_big = float(np.asarray(kl_big, np.float64).sum())
    err_ref = 18.0 - kl_sum_big
    pk_ref = 0.01 * (1.0 / (1.0 + math.exp(min(err_ref, 80.0)))) + 1.0 \
        if err_ref < 80.0 else 1.0
    ik_ref = 0.0 + (-0.001) * err_ref
    wk_ref = pk_ref + ik_ref
    loss_ref_big = kl_sum_big * max(wk_ref, 1.0)
    np.testing.assert_allclose(float(np.asarray(loss_b)), loss_ref_big,
                               rtol=1e-3, atol=1e-3)

    print("KERNEL_OK")
</pallas_src>

<mosaic_0001>
module attributes {stable_mosaic.version = 11 : i64} {
  func.func @_pid_small_kernel(%arg0: i32, %arg1: memref<5xf32, #tpu.memory_space<smem>>, %arg2: memref<2x32xf32, #tpu.memory_space<vmem>>, %arg3: memref<1x128xf32, #tpu.memory_space<vmem>>) attributes {dimension_semantics = [#tpu.dimension_semantics<arbitrary>], iteration_bounds = array<i64: 1>, scalar_prefetch = 0 : i64, scratch_operands = 0 : i64, tpu.core_type = #tpu.core_type<tc>, window_params = [{transform_indices = @transform_0, window_bounds = array<i64: 5>}, {pipeline_mode = #tpu.pipeline_mode<synchronous>, transform_indices = @transform_1, window_bounds = array<i64: 2, 32>}, {pipeline_mode = #tpu.pipeline_mode<synchronous>, transform_indices = @transform_2, window_bounds = array<i64: 1, 128>}]} {
    %c0 = arith.constant 0 : index
    %c0_0 = arith.constant 0 : index
    %0 = vector.load %arg2[%c0, %c0_0] : memref<2x32xf32, #tpu.memory_space<vmem>>, vector<2x32xf32>
    %1 = vector.shape_cast %0 : vector<2x32xf32> to vector<1x2x32xf32>
    %cst = arith.constant dense<0.000000e+00> : vector<1xf32>
    %2 = vector.multi_reduction <add>, %1, %cst [1, 2] : vector<1x2x32xf32> to vector<1xf32>
    %3 = vector.shape_cast %2 : vector<1xf32> to vector<1x1x1xf32>
    %4 = vector.extract %3[0, 0, 0] : f32 from vector<1x1x1xf32>
    %5 = vector.broadcast %4 : f32 to vector<1x1xf32>
    %c0_1 = arith.constant 0 : index
    %6 = memref.load %arg1[%c0_1] : memref<5xf32, #tpu.memory_space<smem>>
    %c1 = arith.constant 1 : index
    %7 = memref.load %arg1[%c1] : memref<5xf32, #tpu.memory_space<smem>>
    %c2 = arith.constant 2 : index
    %8 = memref.load %arg1[%c2] : memref<5xf32, #tpu.memory_space<smem>>
    %c3 = arith.constant 3 : index
    %9 = memref.load %arg1[%c3] : memref<5xf32, #tpu.memory_space<smem>>
    %c4 = arith.constant 4 : index
    %10 = memref.load %arg1[%c4] : memref<5xf32, #tpu.memory_space<smem>>
    %11 = vector.broadcast %6 : f32 to vector<1x1xf32>
    %12 = arith.subf %11, %5 : vector<1x1xf32>
    %13 = math.exp %12 : vector<1x1xf32>
    %cst_2 = arith.constant 1.000000e+00 : f32
    %14 = vector.broadcast %cst_2 : f32 to vector<1x1xf32>
    %15 = arith.addf %14, %13 : vector<1x1xf32>
    %cst_3 = arith.constant 1.000000e+00 : f32
    %16 = vector.broadcast %cst_3 : f32 to vector<1x1xf32>
    %17 = arith.divf %16, %15 : vector<1x1xf32>
    %18 = vector.broadcast %7 : f32 to vector<1x1xf32>
    %19 = arith.mulf %18, %17 : vector<1x1xf32>
    %cst_4 = arith.constant 1.000000e+00 : f32
    %20 = vector.broadcast %cst_4 : f32 to vector<1x1xf32>
    %21 = arith.addf %19, %20 : vector<1x1xf32>
    %22 = vector.broadcast %8 : f32 to vector<1x1xf32>
    %23 = arith.mulf %22, %12 : vector<1x1xf32>
    %24 = vector.broadcast %9 : f32 to vector<1x1xf32>
    %25 = arith.addf %24, %23 : vector<1x1xf32>
    %26 = vector.broadcast %9 : f32 to vector<1x1xf32>
    %27 = vector.broadcast %10 : f32 to vector<1x1xf32>
    %cst_5 = arith.constant 1.000000e+00 : f32
    %28 = vector.broadcast %cst_5 : f32 to vector<1x1xf32>
    %29 = arith.cmpf olt, %27, %28 : vector<1x1xf32>
    %30 = arith.select %29, %26, %25 : vector<1x1xi1>, vector<1x1xf32>
    %31 = arith.addf %21, %30 : vector<1x1xf32>
    %cst_6 = arith.constant 1.000000e+00 : f32
    %32 = vector.broadcast %cst_6 : f32 to vector<1x1xf32>
    %33 = arith.maximumf %31, %32 : vector<1x1xf32>
    %34 = arith.mulf %5, %33 : vector<1x1xf32>
    %35 = tpu.iota {dimensions = array<i32: 1>} : vector<1x128xi32>
    %c0_i32 = arith.constant 0 : i32
    %36 = vector.broadcast %c0_i32 : i32 to vector<1x128xi32>
    %37 = arith.cmpi eq, %35, %36 : vector<1x128xi32>
    %cst_7 = arith.constant 0.000000e+00 : f32
    %38 = vector.shape_cast %34 : vector<1x1xf32> to vector<1x1xf32>
    %39 = vector.broadcast %38 : vector<1x1xf32> to vector<1x128xf32>
    %40 = vector.broadcast %cst_7 : f32 to vector<1x128xf32>
    %41 = arith.select %37, %39, %40 : vector<1x128xi1>, vector<1x128xf32>
    %c1_i32 = arith.constant 1 : i32
    %42 = vector.broadcast %c1_i32 : i32 to vector<1x128xi32>
    %43 = arith.cmpi eq, %35, %42 : vector<1x128xi32>
    %44 = vector.shape_cast %33 : vector<1x1xf32> to vector<1x1xf32>
    %45 = vector.broadcast %44 : vector<1x1xf32> to vector<1x128xf32>
    %46 = arith.select %43, %45, %41 : vector<1x128xi1>, vector<1x128xf32>
    %c2_i32 = arith.constant 2 : i32
    %47 = vector.broadcast %c2_i32 : i32 to vector<1x128xi32>
    %48 = arith.cmpi eq, %35, %47 : vector<1x128xi32>
    %49 = vector.shape_cast %31 : vector<1x1xf32> to vector<1x1xf32>
    %50 = vector.broadcast %49 : vector<1x1xf32> to vector<1x128xf32>
    %51 = arith.select %48, %50, %46 : vector<1x128xi1>, vector<1x128xf32>
    %c3_i32 = arith.constant 3 : i32
    %52 = vector.broadcast %c3_i32 : i32 to vector<1x128xi32>
    %53 = arith.cmpi eq, %35, %52 : vector<1x128xi32>
    %54 = vector.shape_cast %30 : vector<1x1xf32> to vector<1x1xf32>
    %55 = vector.broadcast %54 : vector<1x1xf32> to vector<1x128xf32>
    %56 = arith.select %53, %55, %51 : vector<1x128xi1>, vector<1x128xf32>
    %c4_i32 = arith.constant 4 : i32
    %57 = vector.broadcast %c4_i32 : i32 to vector<1x128xi32>
    %58 = arith.cmpi eq, %35, %57 : vector<1x128xi32>
    %59 = vector.shape_cast %12 : vector<1x1xf32> to vector<1x1xf32>
    %60 = vector.broadcast %59 : vector<1x1xf32> to vector<1x128xf32>
    %61 = arith.select %58, %60, %56 : vector<1x128xi1>, vector<1x128xf32>
    %c0_8 = arith.constant 0 : index
    %c0_9 = arith.constant 0 : index
    %62 = vector.load %arg3[%c0_8, %c0_9] : memref<1x128xf32, #tpu.memory_space<vmem>>, vector<1x128xf32>
    tpu.vector_store %arg3[%c0_8, %c0_9], %61 {strides = array<i32>} : memref<1x128xf32, #tpu.memory_space<vmem>>, vector<1x128xf32>,
    return
  }
  func.func @transform_0(%arg0: i32) -> i32 {
    %c0_i32 = arith.constant 0 : i32
    %c0_i32_0 = arith.constant 0 : i32
    return %c0_i32 : i32
  }
  func.func @transform_1(%arg0: i32) -> (i32, i32) {
    %c0_i32 = arith.constant 0 : i32
    %c0_i32_0 = arith.constant 0 : i32
    %c0_i32_1 = arith.constant 0 : i32
    return %c0_i32, %c0_i32_0 : i32, i32
  }
  func.func @transform_2(%arg0: i32) -> (i32, i32) {
    %c0_i32 = arith.constant 0 : i32
    %c0_i32_0 = arith.constant 0 : i32
    %c0_i32_1 = arith.constant 0 : i32
    return %c0_i32, %c0_i32_0 : i32, i32
  }
}

</mosaic_0001>

<llo_original>
// kernel: _pid_forward.1
$region0: #{_pid_forward.1}
  #allocation0 [shape = 'u32[]', space=smem, size = 0x4, offset = 0x4, fixed_abs, tag = 'smem constant byte address 0x4 - core index']
  #allocation1 [shape = 'u32[144,128]{1,0:T(1,128)}', space=vmem, size = 0x12000, scoped, tag = 'internal scratch']
  %s0 = inlined_call_operand.vmem [shape: f32[5], index: 0, kind: input, shape index: {}]
  %s1 = inlined_call_operand.vmem [shape: f32[2,32], index: 1, kind: input, shape index: {}]
  %s2 = inlined_call_operand.vmem [shape: f32[1,128], index: 2, kind: output, shape index: {}]
  %s3 = sld [smem:[#allocation0]]
  $region22: #{_pid_forward.1} parent=0
    _
  %s5 = ssub.s32 1, %s3
  %s6 = scalar_select 0, %s5, %s3
  $region1: #{_pid_forward.1} parent=0
    #allocation2 [shape = 'u8[512]{0}', space=smem, size = 0x200, scoped, tag = 'input window, operand 0, single buffered']
    #allocation3 [shape = 's32[1]{0}', space=sflag, size = 0x4, scoped, tag = 'scoped memory for _pid_forward.1']
    %7 = vsyncpa [#allocation3], 0
    // Predicated region
    $region2: #{_pid_forward.1} parent=1 // pred_check
      _
    $region3: #{_pid_forward.1} parent=1 // pred_check_branch
      %9 = sbr.rel (0) target = $region5
    $region4: #{_pid_forward.1} parent=1 // pred_region
      %s11 = ssub.s32 16, 16
      %12 = vsyncadd [#allocation3], %s11
      %s14 = sshll.u32 %s0, 4
      %s15 = int_to_ptr.vmem [resolvable:$true] %s14
      %17 = dma.vmem_to_smem %s15, 16, [#allocation2], [#allocation3]
    $region5: #{_pid_forward.1} parent=1 // pred_fallthru
      _
    // Predicated region
    $region6: #{_pid_forward.1} parent=1 // pred_check
      _
    $region7: #{_pid_forward.1} parent=1 // pred_check_branch
      %19 = sbr.rel (0) target = $region9
    $region8: #{_pid_forward.1} parent=1 // pred_region
      _
    $region9: #{_pid_forward.1} parent=1 // pred_fallthru
      _
    // Predicated region
    $region10: #{_pid_forward.1} parent=1 // pred_check
      _
    $region11: #{_pid_forward.1} parent=1 // pred_check_branch
      %21 = sbr.rel (0) target = $region13
    $region12: #{_pid_forward.1} parent=1 // pred_region
      %22 = dma.done [#allocation3], 16
    $region13: #{_pid_forward.1} parent=1 // pred_fallthru
      _
    %23 = sfence
    %v24 = vld [vmem:[%s1] sm:$0x3]
    %vm25 = vcmask 254976
    %v26 = vsel %vm25, %v24, 0.0
    %27 = vadd.xlane.f32.xlu0 %v26
    %v28 = vpop.xlane.xlu0 %27
    %v29 = vrot.slane %v28, 4
    %v30 = vadd.f32 %v28, %v29
    %v31 = vrot.slane %v30, 2
    %v32 = vadd.f32 %v30, %v31
    %v33 = vrot.slane %v32, 1
    %v34 = vadd.f32 %v32, %v33
    %s35 = vtos %v34
    %v36 = vstv %s35
    %s37 = sld [smem:[#allocation2]]
    %s38 = sld [smem:[#allocation2 + $0x1]]
    %s39 = sld [smem:[#allocation2 + $0x2]]
    %s40 = sld [smem:[#allocation2 + $0x3]]
    %s41 = sld [smem:[#allocation2 + $0x4]]
    %v42 = vstv %s37
    %v43 = vsub.f32 %v42, %v36
    %v44 = vmul.f32 %v43, 1.442695
    %v45 = vpow.pop %v44
    %v46 = vadd.f32 %v45, 1.0
    %v47 = vrcp.pop %v46
    %v48 = vmul.f32 1.0, %v47
    %v49 = vstv %s38
    %v50 = vmul.f32 %v49, %v48
    %v51 = vadd.f32 %v50, 1.0
    %v52 = vstv %s39
    %v53 = vmul.f32 %v52, %v43
    %v54 = vstv %s40
    %v55 = vadd.f32 %v54, %v53
    %v56 = vstv %s41
    %vm57 = vcmp.lt.f32.partialorder %v56, 1.0
    %v58 = vsel %vm57, %v54, %v55
    %v59 = vadd.f32 %v51, %v58
    %v60 = vmax.f32 %v59, 1.0
    %v61 = vmul.f32 %v36, %v60
    %v62 = vlaneseq
    %v63 = vand.u32 %v62, 127
    %vm64 = vcmp.eq.s32.totalorder %v63, 0
    %v65 = vsel %vm64, %v61, 0.0
    %vm66 = vcmp.eq.s32.totalorder %v63, 1
    %v67 = vsel %vm66, %v60, %v65
    %vm68 = vcmp.eq.s32.totalorder %v63, 2
    %v69 = vsel %vm68, %v59, %v67
    %vm70 = vcmp.eq.s32.totalorder %v63, 3
    %v71 = vsel %vm70, %v58, %v69
    %vm72 = vcmp.eq.s32.totalorder %v63, 4
    %v73 = vsel %vm72, %v43, %v71
    %74 = vst [vmem:[%s2] sm:$0x1] %v73
    // Predicated region
    $region14: #{_pid_forward.1} parent=1 // pred_check
      _
    $region15: #{_pid_forward.1} parent=1 // pred_check_branch
      %76 = sbr.rel (0) target = $region17
    $region16: #{_pid_forward.1} parent=1 // pred_region
      _
    $region17: #{_pid_forward.1} parent=1 // pred_fallthru
      _
    // Predicated region
    $region18: #{_pid_forward.1} parent=1 // pred_check
      _
    $region19: #{_pid_forward.1} parent=1 // pred_check_branch
      %78 = sbr.rel (0) target = $region21
    $region20: #{_pid_forward.1} parent=1 // pred_region
      _
    $region21: #{_pid_forward.1} parent=1 // pred_fallthru
      _
    %79 = vsyncpa [#allocation3], 1

</llo_original>
